<compile_context>
chip_gen: v5e
topology: v5e:2x2
jax: 0.10.0
libtpu: 0.0.40
codegen_flags: <defaults>
</compile_context>

<pallas_src>
import functools

import jax
import jax.numpy as jnp
from jax.experimental import pallas as pl
from jax.experimental.pallas import tpu as pltpu

LAMBDAS = {"valid": 1.0, "hole": 6.0}

_LANE = 128                    # vreg lane width
_SUBLANE = 8                   # f32 sublane height; accumulators are one vreg
_MAX_BLOCK_ROWS = 2048         # 2048 x 128 f32 = 1 MiB per input tile
_VMEM_LIMIT_BYTES = 32 * 1024 * 1024


@functools.lru_cache(maxsize=1)
def _num_tensorcores():
    """Best-effort TensorCores-per-chip (2 on v7x-class chips, else 1)."""
    try:
        info = pltpu.get_tpu_info()
        for name in ("num_tensorcores", "tensorcores_per_chip", "num_cores",
                     "cores_per_chip", "core_count"):
            val = getattr(info, name, None)
            if isinstance(val, int) and val > 0:
                return min(int(val), 2)
    except Exception:
        pass
    try:
        kind = jax.devices()[0].device_kind.lower()
        if "v7" in kind or "7x" in kind:
            return 2
    except Exception:
        pass
    return 1


def _loss_kernel(mask_ref, out_ref, gt_ref, hole_ref, valid_ref,
                 hole_acc, valid_acc, *, valid_rows, block_rows,
                 blocks_per_core, full_blocks):
    c = pl.program_id(0)   # core / partial index ("parallel")
    i = pl.program_id(1)   # sequential row-tile index ("arbitrary")

    @pl.when(i == 0)
    def _():
        hole_acc[...] = jnp.zeros_like(hole_acc)
        valid_acc[...] = jnp.zeros_like(valid_acc)

    # Stream in native dtype; upcast on the VPU.
    m = mask_ref[...].astype(jnp.float32)
    diff = out_ref[...].astype(jnp.float32) - gt_ref[...].astype(jnp.float32)

    # Exact PyTorch semantics: |(1-m)*d| and |m*d| (no mask-sign assumption).
    hole_term = jnp.abs((1.0 - m) * diff)
    valid_term = jnp.abs(m * diff)

    groups = block_rows // _SUBLANE
    logical_block = c * blocks_per_core + i

    def fold(t):
        # (block_rows, 128) -> (8, 128): pure cross-vreg VALU add tree, no XLU.
        return t.reshape(groups, _SUBLANE, _LANE).sum(axis=0)

    # Fast path: block fully in bounds — unmasked accumulate.
    @pl.when(logical_block < full_blocks)
    def _():
        hole_acc[...] += fold(hole_term)
        valid_acc[...] += fold(valid_term)

    # Slow path: tail block / clamped spare grid steps — mask out-of-range
    # rows (their VMEM contents are unspecified / re-read data).
    @pl.when(logical_block >= full_blocks)
    def _():
        row_idx = logical_block * block_rows + jax.lax.broadcasted_iota(
            jnp.int32, (block_rows, _LANE), 0)
        in_bounds = row_idx < valid_rows
        hole_acc[...] += fold(jnp.where(in_bounds, hole_term, 0.0))
        valid_acc[...] += fold(jnp.where(in_bounds, valid_term, 0.0))

    # Deferred reduction: the single-vreg XLU reduce + SMEM scalar writes run
    # once per core, on the last sequential step.
    @pl.when(i == pl.num_programs(1) - 1)
    def _():
        hole_ref[0, 0] = jnp.sum(hole_acc[...])
        valid_ref[0, 0] = jnp.sum(valid_acc[...])


@jax.jit
def calculate_loss(mask, output, ground_truth):
    """Pallas implementation of CalculateLoss.forward (L1Loss == mean |.|)."""
    assert mask.shape == output.shape == ground_truth.shape
    n_total = int(mask.size)
    if n_total == 0:
        z = jnp.float32(0.0)
        return {"hole": z, "valid": z}

    lane_rem = n_total % _LANE            # <128-element tail handled in JAX
    n_main = n_total - lane_rem

    hole_sum = jnp.float32(0.0)
    valid_sum = jnp.float32(0.0)

    if n_main:
        rows = n_main // _LANE
        if rows > _MAX_BLOCK_ROWS:
            block_rows = _MAX_BLOCK_ROWS  # multiple of 32: OK for any packing
            row_pad = 0
        else:
            # Single full-array block; tiny zero-pad so the 8-row fold works.
            row_pad = (-rows) % _SUBLANE
            block_rows = rows + row_pad
        rows_padded = rows + row_pad

        def as_rows(x):
            flat = x.reshape(-1)
            if lane_rem:
                flat = flat[:n_main]      # rare: count not a multiple of 128
            x2 = flat.reshape(-1, _LANE)  # free for contiguous inputs
            if row_pad:
                x2 = jnp.pad(x2, ((0, row_pad), (0, 0)))  # zeros contribute 0
            return x2

        m2 = as_rows(mask)
        o2 = as_rows(output)
        g2 = as_rows(ground_truth)

        blocks_total = pl.cdiv(rows_padded, block_rows)
        num_cores = max(1, min(_num_tensorcores(), blocks_total))
        blocks_per_core = pl.cdiv(blocks_total, num_cores)
        full_blocks = rows_padded // block_rows   # fully in-bounds blocks
        last_block = blocks_total - 1

        kernel = functools.partial(
            _loss_kernel,
            valid_rows=rows_padded,
            block_rows=block_rows,
            blocks_per_core=blocks_per_core,
            full_blocks=full_blocks,
        )

        if num_cores * blocks_per_core == blocks_total:
            # No spare grid steps -> no per-step index clamp needed.
            def in_map(c, i):
                return (c * blocks_per_core + i, 0)
        else:
            # Clamp so spare steps re-read an in-bounds block; the in-kernel
            # row mask (from the unclamped logical block index) zeroes them.
            def in_map(c, i):
                return (jnp.minimum(c * blocks_per_core + i, last_block), 0)

        tile_spec = pl.BlockSpec((block_rows, _LANE), in_map)
        scalar_out_spec = pl.BlockSpec((1, 1), lambda c, i: (c, 0),
                                       memory_space=pltpu.SMEM)

        hole_part, valid_part = pl.pallas_call(
            kernel,
            out_shape=(jax.ShapeDtypeStruct((num_cores, 1), jnp.float32),
                       jax.ShapeDtypeStruct((num_cores, 1), jnp.float32)),
            grid_spec=pltpu.PrefetchScalarGridSpec(
                num_scalar_prefetch=0,
                grid=(num_cores, blocks_per_core),
                in_specs=[tile_spec, tile_spec, tile_spec],
                out_specs=[scalar_out_spec, scalar_out_spec],
                scratch_shapes=[pltpu.VMEM((_SUBLANE, _LANE), jnp.float32),
                                pltpu.VMEM((_SUBLANE, _LANE), jnp.float32)],
            ),
            compiler_params=pltpu.CompilerParams(
                dimension_semantics=("parallel", "arbitrary"),
                vmem_limit_bytes=_VMEM_LIMIT_BYTES),
        )(m2, o2, g2)

        hole_sum = jnp.sum(hole_part)
        valid_sum = jnp.sum(valid_part)

    if lane_rem:
        # Fold the sub-128-element tail in with plain JAX (tiny).
        tm = mask.reshape(-1)[n_main:].astype(jnp.float32)
        td = (output.reshape(-1)[n_main:].astype(jnp.float32)
              - ground_truth.reshape(-1)[n_main:].astype(jnp.float32))
        hole_sum = hole_sum + jnp.sum(jnp.abs((1.0 - tm) * td))
        valid_sum = valid_sum + jnp.sum(jnp.abs(tm * td))

    inv_n = 1.0 / n_total
    return {"hole": hole_sum * (LAMBDAS["hole"] * inv_n),
            "valid": valid_sum * (LAMBDAS["valid"] * inv_n)}


if __name__ == "__main__":
    key = jax.random.PRNGKey(0)
    k1, k2, k3 = jax.random.split(key, 3)

    # Small image-like shapes: batch=2, channels=4, 16x16 spatial (NCHW).
    shape = (2, 4, 16, 16)
    mask = jax.random.bernoulli(k1, 0.7, shape).astype(jnp.float32)
    output = jax.random.normal(k2, shape, dtype=jnp.float32)
    ground_truth = jax.random.normal(k3, shape, dtype=jnp.float32)

    losses = calculate_loss(mask, output, ground_truth)
    jax.block_until_ready(losses)

    # Pure-JAX reference (L1Loss == mean absolute error).
    diff = output - ground_truth
    ref_hole = jnp.mean(jnp.abs((1.0 - mask) * diff)) * LAMBDAS["hole"]
    ref_valid = jnp.mean(jnp.abs(mask * diff)) * LAMBDAS["valid"]
    assert jnp.allclose(losses["hole"], ref_hole, rtol=1e-5, atol=1e-6)
    assert jnp.allclose(losses["valid"], ref_valid, rtol=1e-5, atol=1e-6)

    print("KERNEL_OK")
</pallas_src>

<mosaic_0001>
module attributes {stable_mosaic.version = 11 : i64} {
  func.func @_loss_kernel(%arg0: i32, %arg1: i32, %arg2: memref<16x128xf32, #tpu.memory_space<vmem>>, %arg3: memref<16x128xf32, #tpu.memory_space<vmem>>, %arg4: memref<16x128xf32, #tpu.memory_space<vmem>>, %arg5: memref<1x1xf32, #tpu.memory_space<smem>>, %arg6: memref<1x1xf32, #tpu.memory_space<smem>>, %arg7: memref<8x128xf32, #tpu.memory_space<vmem>>, %arg8: memref<8x128xf32, #tpu.memory_space<vmem>>) attributes {dimension_semantics = [#tpu.dimension_semantics<parallel>, #tpu.dimension_semantics<arbitrary>], iteration_bounds = array<i64: 1, 1>, scalar_prefetch = 0 : i64, scratch_operands = 2 : i64, tpu.core_type = #tpu.core_type<tc>, window_params = [{transform_indices = @transform_0, window_bounds = array<i64: 16, 128>}, {transform_indices = @transform_1, window_bounds = array<i64: 16, 128>}, {transform_indices = @transform_2, window_bounds = array<i64: 16, 128>}, {transform_indices = @transform_3, window_bounds = array<i64: 1, 1>}, {transform_indices = @transform_4, window_bounds = array<i64: 1, 1>}]} {
    %c0_i32 = arith.constant 0 : i32
    %0 = arith.cmpi eq, %arg1, %c0_i32 : i32
    %1 = arith.extui %0 : i1 to i32
    %c0_i32_0 = arith.constant 0 : i32
    %2 = arith.cmpi ne, %1, %c0_i32_0 : i32
    scf.if %2 {
      %cst_12 = arith.constant 0.000000e+00 : f32
      %24 = vector.broadcast %cst_12 : f32 to vector<8x128xf32>
      %c0_13 = arith.constant 0 : index
      %c0_14 = arith.constant 0 : index
      %25 = vector.load %arg7[%c0_13, %c0_14] : memref<8x128xf32, #tpu.memory_space<vmem>>, vector<8x128xf32>
      tpu.vector_store %arg7[%c0_13, %c0_14], %24 {strides = array<i32>} : memref<8x128xf32, #tpu.memory_space<vmem>>, vector<8x128xf32>,
      %cst_15 = arith.constant 0.000000e+00 : f32
      %26 = vector.broadcast %cst_15 : f32 to vector<8x128xf32>
      %c0_16 = arith.constant 0 : index
      %c0_17 = arith.constant 0 : index
      %27 = vector.load %arg8[%c0_16, %c0_17] : memref<8x128xf32, #tpu.memory_space<vmem>>, vector<8x128xf32>
      tpu.vector_store %arg8[%c0_16, %c0_17], %26 {strides = array<i32>} : memref<8x128xf32, #tpu.memory_space<vmem>>, vector<8x128xf32>,
    } else {
    }
    %c0 = arith.constant 0 : index
    %c0_1 = arith.constant 0 : index
    %3 = vector.load %arg2[%c0, %c0_1] : memref<16x128xf32, #tpu.memory_space<vmem>>, vector<16x128xf32>
    %c0_2 = arith.constant 0 : index
    %c0_3 = arith.constant 0 : index
    %4 = vector.load %arg3[%c0_2, %c0_3] : memref<16x128xf32, #tpu.memory_space<vmem>>, vector<16x128xf32>
    %c0_4 = arith.constant 0 : index
    %c0_5 = arith.constant 0 : index
    %5 = vector.load %arg4[%c0_4, %c0_5] : memref<16x128xf32, #tpu.memory_space<vmem>>, vector<16x128xf32>
    %6 = arith.subf %4, %5 : vector<16x128xf32>
    %cst = arith.constant 1.000000e+00 : f32
    %7 = vector.broadcast %cst : f32 to vector<16x128xf32>
    %8 = arith.subf %7, %3 : vector<16x128xf32>
    %9 = arith.mulf %8, %6 : vector<16x128xf32>
    %10 = math.absf %9 : vector<16x128xf32>
    %11 = arith.mulf %3, %6 : vector<16x128xf32>
    %12 = math.absf %11 : vector<16x128xf32>
    %c1_i32 = arith.constant 1 : i32
    %13 = arith.muli %arg0, %c1_i32 : i32
    %14 = arith.addi %13, %arg1 : i32
    %c1_i32_6 = arith.constant 1 : i32
    %15 = arith.cmpi slt, %14, %c1_i32_6 : i32
    %16 = arith.extui %15 : i1 to i32
    %c0_i32_7 = arith.constant 0 : i32
    %17 = arith.cmpi ne, %16, %c0_i32_7 : i32
    scf.if %17 {
      %c0_12 = arith.constant 0 : index
      %c0_13 = arith.constant 0 : index
      %24 = vector.load %arg7[%c0_12, %c0_13] : memref<8x128xf32, #tpu.memory_space<vmem>>, vector<8x128xf32>
      %25 = vector.shape_cast %10 : vector<16x128xf32> to vector<2x8x128xf32>
      %cst_14 = arith.constant dense<0.000000e+00> : vector<8x128xf32>
      %26 = vector.multi_reduction <add>, %25, %cst_14 [0] : vector<2x8x128xf32> to vector<8x128xf32>
      %27 = arith.addf %24, %26 : vector<8x128xf32>
      %c0_15 = arith.constant 0 : index
      %c0_16 = arith.constant 0 : index
      %28 = vector.load %arg7[%c0_15, %c0_16] : memref<8x128xf32, #tpu.memory_space<vmem>>, vector<8x128xf32>
      tpu.vector_store %arg7[%c0_15, %c0_16], %27 {strides = array<i32>} : memref<8x128xf32, #tpu.memory_space<vmem>>, vector<8x128xf32>,
      %c0_17 = arith.constant 0 : index
      %c0_18 = arith.constant 0 : index
      %29 = vector.load %arg8[%c0_17, %c0_18] : memref<8x128xf32, #tpu.memory_space<vmem>>, vector<8x128xf32>
      %30 = vector.shape_cast %12 : vector<16x128xf32> to vector<2x8x128xf32>
      %cst_19 = arith.constant dense<0.000000e+00> : vector<8x128xf32>
      %31 = vector.multi_reduction <add>, %30, %cst_19 [0] : vector<2x8x128xf32> to vector<8x128xf32>
      %32 = arith.addf %29, %31 : vector<8x128xf32>
      %c0_20 = arith.constant 0 : index
      %c0_21 = arith.constant 0 : index
      %33 = vector.load %arg8[%c0_20, %c0_21] : memref<8x128xf32, #tpu.memory_space<vmem>>, vector<8x128xf32>
      tpu.vector_store %arg8[%c0_20, %c0_21], %32 {strides = array<i32>} : memref<8x128xf32, #tpu.memory_space<vmem>>, vector<8x128xf32>,
    } else {
    }
    %c1_i32_8 = arith.constant 1 : i32
    %18 = arith.cmpi sge, %14, %c1_i32_8 : i32
    %19 = arith.extui %18 : i1 to i32
    %c0_i32_9 = arith.constant 0 : i32
    %20 = arith.cmpi ne, %19, %c0_i32_9 : i32
    scf.if %20 {
      %c16_i32 = arith.constant 16 : i32
      %24 = arith.muli %14, %c16_i32 : i32
      %25 = tpu.iota {dimensions = array<i32: 0>} : vector<16x128xi32>
      %26 = vector.broadcast %24 : i32 to vector<16x128xi32>
      %27 = arith.addi %26, %25 : vector<16x128xi32>
      %c16_i32_12 = arith.constant 16 : i32
      %28 = vector.broadcast %c16_i32_12 : i32 to vector<16x128xi32>
      %29 = arith.cmpi slt, %27, %28 : vector<16x128xi32>
      %c0_13 = arith.constant 0 : index
      %c0_14 = arith.constant 0 : index
      %30 = vector.load %arg7[%c0_13, %c0_14] : memref<8x128xf32, #tpu.memory_space<vmem>>, vector<8x128xf32>
      %cst_15 = arith.constant 0.000000e+00 : f32
      %31 = vector.broadcast %cst_15 : f32 to vector<16x128xf32>
      %32 = arith.select %29, %10, %31 : vector<16x128xi1>, vector<16x128xf32>
      %33 = vector.shape_cast %32 : vector<16x128xf32> to vector<2x8x128xf32>
      %cst_16 = arith.constant dense<0.000000e+00> : vector<8x128xf32>
      %34 = vector.multi_reduction <add>, %33, %cst_16 [0] : vector<2x8x128xf32> to vector<8x128xf32>
      %35 = arith.addf %30, %34 : vector<8x128xf32>
      %c0_17 = arith.constant 0 : index
      %c0_18 = arith.constant 0 : index
      %36 = vector.load %arg7[%c0_17, %c0_18] : memref<8x128xf32, #tpu.memory_space<vmem>>, vector<8x128xf32>
      tpu.vector_store %arg7[%c0_17, %c0_18], %35 {strides = array<i32>} : memref<8x128xf32, #tpu.memory_space<vmem>>, vector<8x128xf32>,
      %c0_19 = arith.constant 0 : index
      %c0_20 = arith.constant 0 : index
      %37 = vector.load %arg8[%c0_19, %c0_20] : memref<8x128xf32, #tpu.memory_space<vmem>>, vector<8x128xf32>
      %cst_21 = arith.constant 0.000000e+00 : f32
      %38 = vector.broadcast %cst_21 : f32 to vector<16x128xf32>
      %39 = arith.select %29, %12, %38 : vector<16x128xi1>, vector<16x128xf32>
      %40 = vector.shape_cast %39 : vector<16x128xf32> to vector<2x8x128xf32>
      %cst_22 = arith.constant dense<0.000000e+00> : vector<8x128xf32>
      %41 = vector.multi_reduction <add>, %40, %cst_22 [0] : vector<2x8x128xf32> to vector<8x128xf32>
      %42 = arith.addf %37, %41 : vector<8x128xf32>
      %c0_23 = arith.constant 0 : index
      %c0_24 = arith.constant 0 : index
      %43 = vector.load %arg8[%c0_23, %c0_24] : memref<8x128xf32, #tpu.memory_space<vmem>>, vector<8x128xf32>
      tpu.vector_store %arg8[%c0_23, %c0_24], %42 {strides = array<i32>} : memref<8x128xf32, #tpu.memory_space<vmem>>, vector<8x128xf32>,
    } else {
    }
    %c0_i32_10 = arith.constant 0 : i32
    %21 = arith.cmpi eq, %arg1, %c0_i32_10 : i32
    %22 = arith.extui %21 : i1 to i32
    %c0_i32_11 = arith.constant 0 : i32
    %23 = arith.cmpi ne, %22, %c0_i32_11 : i32
    scf.if %23 {
      %c0_12 = arith.constant 0 : index
      %c0_13 = arith.constant 0 : index
      %24 = vector.load %arg7[%c0_12, %c0_13] : memref<8x128xf32, #tpu.memory_space<vmem>>, vector<8x128xf32>
      %25 = vector.shape_cast %24 : vector<8x128xf32> to vector<1x8x128xf32>
      %cst_14 = arith.constant dense<0.000000e+00> : vector<1xf32>
      %26 = vector.multi_reduction <add>, %25, %cst_14 [1, 2] : vector<1x8x128xf32> to vector<1xf32>
      %27 = vector.shape_cast %26 : vector<1xf32> to vector<1x1x1xf32>
      %28 = vector.extract %27[0, 0, 0] : f32 from vector<1x1x1xf32>
      %c0_15 = arith.constant 0 : index
      %c0_16 = arith.constant 0 : index
      %29 = memref.load %arg5[%c0_15, %c0_16] : memref<1x1xf32, #tpu.memory_space<smem>>
      memref.store %28, %arg5[%c0_15, %c0_16] : memref<1x1xf32, #tpu.memory_space<smem>>
      %c0_17 = arith.constant 0 : index
      %c0_18 = arith.constant 0 : index
      %30 = vector.load %arg8[%c0_17, %c0_18] : memref<8x128xf32, #tpu.memory_space<vmem>>, vector<8x128xf32>
      %31 = vector.shape_cast %30 : vector<8x128xf32> to vector<1x8x128xf32>
      %cst_19 = arith.constant dense<0.000000e+00> : vector<1xf32>
      %32 = vector.multi_reduction <add>, %31, %cst_19 [1, 2] : vector<1x8x128xf32> to vector<1xf32>
      %33 = vector.shape_cast %32 : vector<1xf32> to vector<1x1x1xf32>
      %34 = vector.extract %33[0, 0, 0] : f32 from vector<1x1x1xf32>
      %c0_20 = arith.constant 0 : index
      %c0_21 = arith.constant 0 : index
      %35 = memref.load %arg6[%c0_20, %c0_21] : memref<1x1xf32, #tpu.memory_space<smem>>
      memref.store %34, %arg6[%c0_20, %c0_21] : memref<1x1xf32, #tpu.memory_space<smem>>
    } else {
    }
    return
  }
  func.func @transform_0(%arg0: i32, %arg1: i32) -> (i32, i32) {
    %c1_i32 = arith.constant 1 : i32
    %0 = arith.muli %arg0, %c1_i32 : i32
    %1 = arith.addi %0, %arg1 : i32
    %c0_i32 = arith.constant 0 : i32
    %c0_i32_0 = arith.constant 0 : i32
    return %1, %c0_i32 : i32, i32
  }
  func.func @transform_1(%arg0: i32, %arg1: i32) -> (i32, i32) {
    %c1_i32 = arith.constant 1 : i32
    %0 = arith.muli %arg0, %c1_i32 : i32
    %1 = arith.addi %0, %arg1 : i32
    %c0_i32 = arith.constant 0 : i32
    %c0_i32_0 = arith.constant 0 : i32
    return %1, %c0_i32 : i32, i32
  }
  func.func @transform_2(%arg0: i32, %arg1: i32) -> (i32, i32) {
    %c1_i32 = arith.constant 1 : i32
    %0 = arith.muli %arg0, %c1_i32 : i32
    %1 = arith.addi %0, %arg1 : i32
    %c0_i32 = arith.constant 0 : i32
    %c0_i32_0 = arith.constant 0 : i32
    return %1, %c0_i32 : i32, i32
  }
  func.func @transform_3(%arg0: i32, %arg1: i32) -> (i32, i32) {
    %c0_i32 = arith.constant 0 : i32
    %c0_i32_0 = arith.constant 0 : i32
    return %arg0, %c0_i32 : i32, i32
  }
  func.func @transform_4(%arg0: i32, %arg1: i32) -> (i32, i32) {
    %c0_i32 = arith.constant 0 : i32
    %c0_i32_0 = arith.constant 0 : i32
    return %arg0, %c0_i32 : i32, i32
  }
}

</mosaic_0001>

<llo_original>
// kernel: calculate_loss.1
$region0: #{calculate_loss.1}
  #allocation0 [shape = 'u32[]', space=smem, size = 0x4, offset = 0x4, fixed_abs, tag = 'smem constant byte address 0x4 - core index']
  #allocation1 [shape = 'u32[72,128]{1,0:T(1,128)}', space=vmem, size = 0x9000, scoped, tag = 'internal scratch']
  #allocation2 [shape = 'f32[8,128]{1,0:T(8,128)}', space=vmem, size = 0x1000, scoped, tag = 'scratch operand']
  #allocation3 [shape = 'f32[8,128]{1,0:T(8,128)}', space=vmem, size = 0x1000, scoped, tag = 'scratch operand']
  %s0 = inlined_call_operand.vmem [shape: f32[16,128], index: 0, kind: input, shape index: {}]
  %s1 = inlined_call_operand.vmem [shape: f32[16,128], index: 1, kind: input, shape index: {}]
  %s2 = inlined_call_operand.vmem [shape: f32[16,128], index: 2, kind: input, shape index: {}]
  %s3 = inlined_call_operand.hbm [shape: f32[1,1], index: 3, kind: output, shape index: {0}]
  %s4 = inlined_call_operand.hbm [shape: f32[1,1], index: 4, kind: output, shape index: {1}]
  %5 = xla_tuple %s3, %s4
  %s6 = sld [smem:[#allocation0]]
  $region46: #{calculate_loss.1} parent=0
    _
  %s8 = ssub.s32 1, %s6
  %s9 = scalar_select 0, %s8, %s6
  $region1: #{calculate_loss.1} parent=0
    #allocation4 [shape = 'u8[512]{0}', space=smem, size = 0x200, scoped, tag = 'output window, operand 0, single buffered']
    #allocation5 [shape = 's32[1]{0}', space=sflag, size = 0x4, scoped, tag = 'scoped memory for calculate_loss.1']
    #allocation6 [shape = 'u8[512]{0}', space=smem, size = 0x200, scoped, tag = 'output window, operand 1, single buffered']
    #allocation7 [shape = 's32[1]{0}', space=sflag, size = 0x4, scoped, tag = 'scoped memory for calculate_loss.1']
    %10 = vsyncpa [#allocation5], 0
    %11 = vsyncpa [#allocation7], 0
    // Predicated region
    $region2: #{calculate_loss.1} parent=1 // pred_check
      _
    $region3: #{calculate_loss.1} parent=1 // pred_check_branch
      %13 = sbr.rel (0) target = $region5
    $region4: #{calculate_loss.1} parent=1 // pred_region
      %s14 = sadd.s32 0, 0
      %s15 = smul.u32 2, %s14
      %p16 = scmp.lt.s32.totalorder %s15, 1
      %s17 = scalar_select %p16, %s15, 1
      %s18 = smul.addr %s17, 8
      %s19 = scalar_lea.vmem %s0, %s18
      %s20 = sadd.s32 0, 0
      %s21 = smul.u32 2, %s20
    $region5: #{calculate_loss.1} parent=1 // pred_fallthru
      _
    // Predicated region
    $region6: #{calculate_loss.1} parent=1 // pred_check
      _
    $region7: #{calculate_loss.1} parent=1 // pred_check_branch
      %23 = sbr.rel (0) target = $region9
    $region8: #{calculate_loss.1} parent=1 // pred_region
      %s24 = sadd.s32 0, 0
      %s25 = smul.u32 2, %s24
      %p26 = scmp.lt.s32.totalorder %s25, 1
      %s27 = scalar_select %p26, %s25, 1
      %s28 = smul.addr %s27, 8
      %s29 = scalar_lea.vmem %s1, %s28
      %s30 = sadd.s32 0, 0
      %s31 = smul.u32 2, %s30
    $region9: #{calculate_loss.1} parent=1 // pred_fallthru
      _
    // Predicated region
    $region10: #{calculate_loss.1} parent=1 // pred_check
      _
    $region11: #{calculate_loss.1} parent=1 // pred_check_branch
      %33 = sbr.rel (0) target = $region13
    $region12: #{calculate_loss.1} parent=1 // pred_region
      %s34 = sadd.s32 0, 0
      %s35 = smul.u32 2, %s34
      %p36 = scmp.lt.s32.totalorder %s35, 1
      %s37 = scalar_select %p36, %s35, 1
      %s38 = smul.addr %s37, 8
      %s39 = scalar_lea.vmem %s2, %s38
      %s40 = sadd.s32 0, 0
      %s41 = smul.u32 2, %s40
    $region13: #{calculate_loss.1} parent=1 // pred_fallthru
      _
    %s42 = sadd.s32 0, 0
    %s43 = smul.u32 2, %s42
    %p44 = scmp.lt.s32.totalorder %s43, 1
    %s45 = scalar_select %p44, %s43, 1
    %s46 = smul.addr %s45, 8
    %s47 = scalar_lea.vmem %s0, %s46
    %s48 = sadd.s32 0, 0
    %s49 = smul.u32 2, %s48
    %p50 = scmp.lt.s32.totalorder %s49, 1
    %s51 = scalar_select %p50, %s49, 1
    %s52 = smul.addr %s51, 8
    %s53 = scalar_lea.vmem %s1, %s52
    %s54 = sadd.s32 0, 0
    %s55 = smul.u32 2, %s54
    %p56 = scmp.lt.s32.totalorder %s55, 1
    %s57 = scalar_select %p56, %s55, 1
    %s58 = smul.addr %s57, 8
    %s59 = scalar_lea.vmem %s2, %s58
    %s60 = sadd.s32 0, 0
    %s61 = smul.u32 2, %s60
    %p62 = scmp.lt.s32.totalorder %s61, 1
    %s63 = scalar_select %p62, %s61, 1
    %s64 = smul.addr %s63, 8
    %s65 = scalar_lea.vmem %s0, %s64
    %s66 = sadd.s32 0, 0
    %s67 = smul.u32 2, %s66
    %s68 = sadd.s32 0, 0
    %s69 = smul.u32 2, %s68
    %p70 = scmp.lt.s32.totalorder %s69, 1
    %s71 = scalar_select %p70, %s69, 1
    %s72 = smul.addr %s71, 8
    %s73 = scalar_lea.vmem %s1, %s72
    %s74 = sadd.s32 0, 0
    %s75 = smul.u32 2, %s74
    %s76 = sadd.s32 0, 0
    %s77 = smul.u32 2, %s76
    %p78 = scmp.lt.s32.totalorder %s77, 1
    %s79 = scalar_select %p78, %s77, 1
    %s80 = smul.addr %s79, 8
    %s81 = scalar_lea.vmem %s2, %s80
    %s82 = sadd.s32 0, 0
    %s83 = smul.u32 2, %s82
    %p84 = scmp.eq.s32.totalorder 0, 0
    // Predicated region
    $region14: #{calculate_loss.1} parent=1 // pred_check
      %p85 = pneg %p84
    $region15: #{calculate_loss.1} parent=1 // pred_check_branch
      %87 = sbr.rel (%p85) target = $region17
    $region16: #{calculate_loss.1} parent=1 // pred_region
      %88 = vst [vmem:[#allocation2] sm:$0xff] 0.0
      %89 = vst [vmem:[#allocation3] sm:$0xff] 0.0
    $region17: #{calculate_loss.1} parent=1 // pred_fallthru
      _
    %v90 = vld [vmem:[%s65] sm:$0xff]
    %v91 = vld [vmem:[%s65 + $0x8] sm:$0xff]
    %v92 = vld [vmem:[%s73] sm:$0xff]
    %v93 = vld [vmem:[%s73 + $0x8] sm:$0xff]
    %v94 = vld [vmem:[%s81] sm:$0xff]
    %v95 = vld [vmem:[%s81 + $0x8] sm:$0xff]
    %v96 = vsub.f32 %v92, %v94
    %v97 = vsub.f32 %v93, %v95
    %v98 = vsub.f32 1.0, %v90
    %v99 = vsub.f32 1.0, %v91
    %v100 = vmul.f32 %v98, %v96
    %v101 = vmul.f32 %v99, %v97
    %v102 = vand.u32 2147483647, %v100
    %v103 = vand.u32 2147483647, %v101
    %v104 = vmul.f32 %v90, %v96
    %v105 = vmul.f32 %v91, %v97
    %v106 = vand.u32 2147483647, %v104
    %v107 = vand.u32 2147483647, %v105
    %s108 = sadd.s32 0, 0
    %p109 = scmp.lt.s32.totalorder %s108, 1
    // Predicated region
    $region18: #{calculate_loss.1} parent=1 // pred_check
      %p110 = pneg %p109
    $region19: #{calculate_loss.1} parent=1 // pred_check_branch
      %112 = sbr.rel (%p110) target = $region21
    $region20: #{calculate_loss.1} parent=1 // pred_region
      %v113 = vld [vmem:[#allocation2] sm:$0xff]
      %v114 = vadd.f32 %v102, %v103
      %v115 = vadd.f32 %v113, %v114
      %116 = vst [vmem:[#allocation2] sm:$0xff] %v115
      %v117 = vld [vmem:[#allocation3] sm:$0xff]
      %v118 = vadd.f32 %v106, %v107
      %v119 = vadd.f32 %v117, %v118
      %120 = vst [vmem:[#allocation3] sm:$0xff] %v119
    $region21: #{calculate_loss.1} parent=1 // pred_fallthru
      _
    %p121 = scmp.ge.s32.totalorder %s108, 1
    // Predicated region
    $region22: #{calculate_loss.1} parent=1 // pred_check
      %p122 = pneg %p121
    $region23: #{calculate_loss.1} parent=1 // pred_check_branch
      %124 = sbr.rel (%p122) target = $region25
    $region24: #{calculate_loss.1} parent=1 // pred_region
      %s125 = smul.u32 %s108, 16
      %v126 = vlaneseq
      %v127 = vshrl.u32 %v126, 7
      %v128 = vadd.s32 %v127, 8
      %v129 = vstv %s125
      %v130 = vadd.s32 %v129, %v127
      %v131 = vadd.s32 %v129, %v128
      %vm132 = vcmp.lt.s32.totalorder %v130, 16
      %vm133 = vcmp.lt.s32.totalorder %v131, 16
      %v134 = vld [vmem:[#allocation2] sm:$0xff]
      %v135 = vsel %vm132, %v102, 0.0
      %v136 = vsel %vm133, %v103, 0.0
      %v137 = vadd.f32 %v135, %v136
      %v138 = vadd.f32 %v134, %v137
      %139 = vst [vmem:[#allocation2] sm:$0xff] %v138
      %v140 = vld [vmem:[#allocation3] sm:$0xff]
      %v141 = vsel %vm132, %v106, 0.0
      %v142 = vsel %vm133, %v107, 0.0
      %v143 = vadd.f32 %v141, %v142
      %v144 = vadd.f32 %v140, %v143
      %145 = vst [vmem:[#allocation3] sm:$0xff] %v144
    $region25: #{calculate_loss.1} parent=1 // pred_fallthru
      _
    // Predicated region
    $region26: #{calculate_loss.1} parent=1 // pred_check
      %p146 = pneg %p84
    $region27: #{calculate_loss.1} parent=1 // pred_check_branch
      %148 = sbr.rel (%p146) target = $region29
    $region28: #{calculate_loss.1} parent=1 // pred_region
      %v149 = vld [vmem:[#allocation2] sm:$0xff]
      %150 = vadd.xlane.f32.xlu0 %v149
      %v151 = vpop.xlane.xlu0 %150
      %v152 = vrot.slane %v151, 4
      %v153 = vadd.f32 %v151, %v152
      %v154 = vrot.slane %v153, 2
      %v155 = vadd.f32 %v153, %v154
      %v156 = vrot.slane %v155, 1
      %v157 = vadd.f32 %v155, %v156
      %s158 = vtos %v157
      %s159 = scalar_lea.smem [#allocation4], 0
      %160 = sst [smem:[%s159]] %s158
      %v161 = vld [vmem:[#allocation3] sm:$0xff]
      %162 = vadd.xlane.f32.xlu0 %v161
      %v163 = vpop.xlane.xlu0 %162
      %v164 = vrot.slane %v163, 4
      %v165 = vadd.f32 %v163, %v164
      %v166 = vrot.slane %v165, 2
      %v167 = vadd.f32 %v165, %v166
      %v168 = vrot.slane %v167, 1
      %v169 = vadd.f32 %v167, %v168
      %s170 = vtos %v169
      %s171 = scalar_lea.smem [#allocation6], 0
      %172 = sst [smem:[%s171]] %s170
    $region29: #{calculate_loss.1} parent=1 // pred_fallthru
      _
    // Predicated region
    $region30: #{calculate_loss.1} parent=1 // pred_check
      _
    $region31: #{calculate_loss.1} parent=1 // pred_check_branch
      %174 = sbr.rel (0) target = $region33
    $region32: #{calculate_loss.1} parent=1 // pred_region
      %176 = vsyncadd [#allocation5], 0
      %s178 = sshll.u32 %s3, 4
      %s179 = int_to_ptr.hbm [resolvable:$true] %s178
      %181 = dma.smem_to_hbm [#allocation4], 16, %s179, [#allocation5]
    $region33: #{calculate_loss.1} parent=1 // pred_fallthru
      _
    // Predicated region
    $region34: #{calculate_loss.1} parent=1 // pred_check
      _
    $region35: #{calculate_loss.1} parent=1 // pred_check_branch
      %183 = sbr.rel (0) target = $region37
    $region36: #{calculate_loss.1} parent=1 // pred_region
      %185 = vsyncadd [#allocation7], 0
      %s187 = sshll.u32 %s4, 4
      %s188 = int_to_ptr.hbm [resolvable:$true] %s187
      %190 = dma.smem_to_hbm [#allocation6], 16, %s188, [#allocation7]
    $region37: #{calculate_loss.1} parent=1 // pred_fallthru
      _
    // Predicated region
    $region38: #{calculate_loss.1} parent=1 // pred_check
      _
    $region39: #{calculate_loss.1} parent=1 // pred_check_branch
      %192 = sbr.rel (0) target = $region41
    $region40: #{calculate_loss.1} parent=1 // pred_region
      %194 = dma.done [#allocation5], 16
    $region41: #{calculate_loss.1} parent=1 // pred_fallthru
      _
    // Predicated region
    $region42: #{calculate_loss.1} parent=1 // pred_check
      _
    $region43: #{calculate_loss.1} parent=1 // pred_check_branch
      %196 = sbr.rel (0) target = $region45
    $region44: #{calculate_loss.1} parent=1 // pred_region
      %198 = dma.done [#allocation7], 16
    $region45: #{calculate_loss.1} parent=1 // pred_fallthru
      _
    %199 = sfence
    %200 = vsyncpa [#allocation5], 1
    %201 = vsyncpa [#allocation7], 1

</llo_original>
